<compile_context>
chip_gen: v6e
topology: v6e:2x2x1
jax: 0.10.0
libtpu: 0.0.40
codegen_flags: <defaults>
</compile_context>

<pallas_src>
import functools
import math

import jax
import jax.numpy as jnp
from jax.experimental import pallas as pl
from jax.experimental.pallas import tpu as pltpu

NEG_INF = -1e30  # large finite negative (bf16/f32 safe, no inf arithmetic)


def _choose_tile(total, target):
    """Largest tile <= target dividing `total`, preferring 128-aligned, then
    16/8-aligned tiles (falls back to the full extent, always legal)."""
    if total <= target:
        return total
    for align in (128, 16, 8):
        start = target - (target % align)
        for cand in range(start, align - 1, -align):
            if total % cand == 0:
                return cand
    return total


def _nbytes(shape, dtype):
    return math.prod(shape) * jnp.dtype(dtype).itemsize


def _vmem_cap_bytes():
    try:
        cap = getattr(pltpu.get_tpu_info(), "vmem_capacity_bytes", None)
        if cap:
            return int(cap)
    except Exception:
        pass
    return 64 * 2**20  # conservative fallback: v7x physical VMEM


def _vmem_limit(nbytes):
    cap = int(_vmem_cap_bytes() * 3 // 4)  # ~25% headroom for Mosaic scratch
    return int(min(cap, max(16 * 2**20, 2 * nbytes)))


# --------------------------------------------------------------------------
# Kernel 1: fused Q/K/V projections, written directly in grouped layout
# --------------------------------------------------------------------------
def _qkv_proj_kernel(x_ref, wq_ref, wk_ref, wv_ref, q_ref, k_ref, v_ref, *, cdt):
    x = x_ref[0].astype(cdt)                               # (tp, d_in)
    q_ref[0, 0] = jnp.dot(x, wq_ref[...],
                          preferred_element_type=jnp.float32).astype(q_ref.dtype)
    k_ref[0, 0] = jnp.dot(x, wk_ref[...],
                          preferred_element_type=jnp.float32).astype(k_ref.dtype)
    v_ref[0, 0] = jnp.dot(x, wv_ref[...],
                          preferred_element_type=jnp.float32).astype(v_ref.dtype)


# --------------------------------------------------------------------------
# Kernel 2: flash attention (head-group blocked) + fused output projection
# --------------------------------------------------------------------------
def _flash_attn_kernel(q_ref, k_ref, v_ref, wo_ref, bo_ref, o_ref,
                       m_ref, l_ref, acc_ref, oacc_ref,
                       *, heads_per_group, head_dim, q_tile, kv_tile,
                       approx_recip):
    qi = pl.program_id(1)
    g = pl.program_id(2)
    ki = pl.program_id(3)
    n_g = pl.num_programs(2)
    n_kv = pl.num_programs(3)

    hg, hd = heads_per_group, head_dim
    tq, tk = q_tile, kv_tile
    scale = 1.0 / math.sqrt(hd)
    q_start = qi * tq
    k_start = ki * tk

    # Init output-projection accumulator at the first reduction step of (b, qi).
    @pl.when(jnp.logical_and(g == 0, ki == 0))
    def _():
        oacc_ref[...] = jnp.zeros_like(oacc_ref)

    # Init per-head online-softmax state at the start of each group's KV sweep.
    @pl.when(ki == 0)
    def _():
        m_ref[...] = jnp.full_like(m_ref, NEG_INF)
        l_ref[...] = jnp.zeros_like(l_ref)
        acc_ref[...] = jnp.zeros_like(acc_ref)

    def process_block(masked):
        q = q_ref[0, 0]                                    # (tq, hg*hd) compute dtype
        k = k_ref[0, 0]                                    # (tk, hg*hd)
        v = v_ref[0, 0]                                    # (tk, hg*hd)
        if masked:
            # Mask computed once, shared by every head in the group.
            row = q_start + jax.lax.broadcasted_iota(jnp.int32, (tq, tk), 0)
            col = k_start + jax.lax.broadcasted_iota(jnp.int32, (tq, tk), 1)
            keep = col <= row
        for h in range(hg):                                # static unrolled loop
            lo, hi = h * hd, (h + 1) * hd
            sl = pl.ds(lo, hd)
            # q @ k^T without an explicit transpose: contract the last dims.
            s = jax.lax.dot_general(
                q[:, lo:hi], k[:, lo:hi], (((1,), (1,)), ((), ())),
                preferred_element_type=jnp.float32) * scale    # (tq, tk) f32
            if masked:
                s = jnp.where(keep, s, NEG_INF)
            m_prev = m_ref[h]                              # (tq, 1)
            m_new = jnp.maximum(m_prev, jnp.max(s, axis=-1, keepdims=True))
            alpha = jnp.exp(m_prev - m_new)
            p = jnp.exp(s - m_new)                         # (tq, tk) f32
            l_ref[h] = alpha * l_ref[h] + jnp.sum(p, axis=-1, keepdims=True)
            acc_ref[:, sl] = alpha * acc_ref[:, sl] + jnp.dot(
                p.astype(v.dtype), v[:, lo:hi],
                preferred_element_type=jnp.float32)
            m_ref[h] = m_new

    # Fully-visible KV blocks (strictly below the diagonal): no mask work.
    @pl.when(k_start + (tk - 1) <= q_start)
    def _():
        process_block(masked=False)

    # Diagonal-straddling blocks: apply the in-block causal mask.
    @pl.when(jnp.logical_and(k_start + (tk - 1) > q_start,
                             k_start <= q_start + (tq - 1)))
    def _():
        process_block(masked=True)
    # Fully-future blocks: compute skipped; their K/V fetch is deduped by the
    # clamped index_map in the wrapper.

    # Group finalize: normalize each head in place (the ctx accumulator is
    # already packed head-major) and fold the (tq, hg*hd) slab into the output
    # projection with a single K = hg*hd MXU dot.
    @pl.when(ki == n_kv - 1)
    def _():
        for h in range(hg):
            sl = pl.ds(h * hd, hd)
            inv_l = pl.reciprocal(l_ref[h], approx=approx_recip)   # (tq, 1)
            acc_ref[:, sl] = acc_ref[:, sl] * inv_l
        ctx = acc_ref[...].astype(wo_ref.dtype)            # (tq, hg*hd)
        oacc_ref[...] += jnp.dot(ctx, wo_ref[...],
                                 preferred_element_type=jnp.float32)

    # Final write once per (b, qi): add bias, cast, single lane-dense store.
    @pl.when(jnp.logical_and(g == n_g - 1, ki == n_kv - 1))
    def _():
        o_ref[0] = (oacc_ref[...] + bo_ref[...]).astype(o_ref.dtype)


# --------------------------------------------------------------------------
# Wrapper
# --------------------------------------------------------------------------
def mha_forward(x, wq, wk, wv, wo, bo, num_heads, *,
                q_block=512, kv_block=512, proj_block=512,
                compute_dtype=jnp.bfloat16, approx_recip=True):
    """Causal MHA forward (eval mode).  Weights stored as (in, out): y = x @ W."""
    B, T, d_in = x.shape
    d_out = wq.shape[1]
    assert d_out % num_heads == 0, "d_out must be divisible by num_heads"
    head_dim = d_out // num_heads
    out_dtype = x.dtype
    cdt = compute_dtype

    # Head grouping: hg heads (lane width gw = hg*head_dim, ideally 128) per
    # grid step -> fewer grid steps and a K = gw fused output-projection dot.
    hg = max(1, min(num_heads, 128 // max(1, head_dim)))
    while num_heads % hg:
        hg -= 1
    G = num_heads // hg
    gw = hg * head_dim

    # ---- Kernel 1: Q/K/V projections, grouped output layout ----------------
    tp = _choose_tile(T, proj_block)
    n_tp = T // tp
    qkv_shape = jax.ShapeDtypeStruct((B, G, T, gw), cdt)
    proj_vmem = 2 * (_nbytes((tp, d_in), x.dtype)
                     + 3 * _nbytes((d_in, gw), cdt)
                     + 3 * _nbytes((tp, gw), cdt))
    wq_c, wk_c, wv_c = (w.astype(cdt) for w in (wq, wk, wv))

    q, k, v = pl.pallas_call(
        functools.partial(_qkv_proj_kernel, cdt=cdt),
        out_shape=(qkv_shape, qkv_shape, qkv_shape),
        grid=(B, n_tp, G),
        in_specs=[
            pl.BlockSpec((1, tp, d_in), lambda b, i, g: (b, i, 0)),
            pl.BlockSpec((d_in, gw), lambda b, i, g: (0, g)),
            pl.BlockSpec((d_in, gw), lambda b, i, g: (0, g)),
            pl.BlockSpec((d_in, gw), lambda b, i, g: (0, g)),
        ],
        out_specs=(
            pl.BlockSpec((1, 1, tp, gw), lambda b, i, g: (b, g, i, 0)),
            pl.BlockSpec((1, 1, tp, gw), lambda b, i, g: (b, g, i, 0)),
            pl.BlockSpec((1, 1, tp, gw), lambda b, i, g: (b, g, i, 0)),
        ),
        compiler_params=pltpu.CompilerParams(
            dimension_semantics=("parallel", "parallel", "parallel"),
            vmem_limit_bytes=_vmem_limit(proj_vmem)),
    )(x, wq_c, wk_c, wv_c)

    # ---- Kernel 2: flash attention + fused output projection ---------------
    tq = _choose_tile(T, q_block)
    tk = _choose_tile(T, kv_block)
    n_q, n_kv = T // tq, T // tk

    wo_c = wo.astype(cdt)
    bo_2d = bo.reshape(1, d_out).astype(jnp.float32)

    # Clamp the K/V block index so fully-future causal blocks reuse the last
    # visible block; the pipeline dedups the repeated fetch (~2x less K/V HBM
    # traffic).  The in-kernel pl.when still skips the compute.
    def kv_index_map(b, qi, g, ki):
        last = (qi * tq + tq - 1) // tk
        return (b, g, jnp.minimum(ki, last), 0)

    attn_vmem = (2 * (_nbytes((tq, gw), cdt)
                      + 2 * _nbytes((tk, gw), cdt)
                      + _nbytes((gw, d_out), cdt)
                      + _nbytes((1, d_out), jnp.float32)
                      + _nbytes((tq, d_out), out_dtype))
                 + 2 * _nbytes((hg, tq, 1), jnp.float32)
                 + _nbytes((tq, gw), jnp.float32)
                 + _nbytes((tq, d_out), jnp.float32))

    out = pl.pallas_call(
        functools.partial(_flash_attn_kernel, heads_per_group=hg,
                          head_dim=head_dim, q_tile=tq, kv_tile=tk,
                          approx_recip=approx_recip),
        out_shape=jax.ShapeDtypeStruct((B, T, d_out), out_dtype),
        grid=(B, n_q, G, n_kv),
        in_specs=[
            pl.BlockSpec((1, 1, tq, gw), lambda b, qi, g, ki: (b, g, qi, 0)),
            pl.BlockSpec((1, 1, tk, gw), kv_index_map),
            pl.BlockSpec((1, 1, tk, gw), kv_index_map),
            pl.BlockSpec((gw, d_out), lambda b, qi, g, ki: (g, 0)),
            pl.BlockSpec((1, d_out), lambda b, qi, g, ki: (0, 0)),
        ],
        out_specs=pl.BlockSpec((1, tq, d_out), lambda b, qi, g, ki: (b, qi, 0)),
        scratch_shapes=[
            pltpu.VMEM((hg, tq, 1), jnp.float32),    # per-head running max m
            pltpu.VMEM((hg, tq, 1), jnp.float32),    # per-head running sum l
            pltpu.VMEM((tq, gw), jnp.float32),       # packed context accumulator
            pltpu.VMEM((tq, d_out), jnp.float32),    # output-projection accumulator
        ],
        compiler_params=pltpu.CompilerParams(
            dimension_semantics=("parallel", "parallel", "arbitrary", "arbitrary"),
            vmem_limit_bytes=_vmem_limit(attn_vmem)),
    )(q, k, v, wo_c, bo_2d)

    return out


# --------------------------------------------------------------------------
# Pure-JAX reference (matches the PyTorch forward in eval mode)
# --------------------------------------------------------------------------
def mha_reference(x, wq, wk, wv, wo, bo, num_heads):
    B, T, d_in = x.shape
    d_out = wq.shape[1]
    hd = d_out // num_heads
    q = (x @ wq).reshape(B, T, num_heads, hd).transpose(0, 2, 1, 3)
    k = (x @ wk).reshape(B, T, num_heads, hd).transpose(0, 2, 1, 3)
    v = (x @ wv).reshape(B, T, num_heads, hd).transpose(0, 2, 1, 3)
    s = jnp.einsum("bhqd,bhkd->bhqk", q, k)
    mask = jnp.triu(jnp.ones((T, T), dtype=bool), k=1)
    s = jnp.where(mask, -jnp.inf, s)
    w = jax.nn.softmax(s / (hd ** 0.5), axis=-1)
    ctx = jnp.einsum("bhqk,bhkd->bhqd", w, v).transpose(0, 2, 1, 3).reshape(B, T, d_out)
    return ctx @ wo + bo


if __name__ == "__main__":
    # Small shapes consistent with the module's forward.
    B, T = 2, 8
    d_in, d_out = 32, 32
    num_heads = 4

    key = jax.random.PRNGKey(0)
    kx, kq, kk, kv_, ko, kb = jax.random.split(key, 6)

    x = jax.random.normal(kx, (B, T, d_in), dtype=jnp.float32)
    # Deterministic parameter init (weights stored as (in, out) == W^T).
    wq = jax.random.normal(kq, (d_in, d_out), dtype=jnp.float32) * 0.1
    wk = jax.random.normal(kk, (d_in, d_out), dtype=jnp.float32) * 0.1
    wv = jax.random.normal(kv_, (d_in, d_out), dtype=jnp.float32) * 0.1
    wo = jax.random.normal(ko, (d_out, d_out), dtype=jnp.float32) * 0.1
    bo = jax.random.normal(kb, (d_out,), dtype=jnp.float32) * 0.1

    ref = mha_reference(x, wq, wk, wv, wo, bo, num_heads)

    # f32 MXU path + exact reciprocal: tight check of the flash-attention logic.
    out_f32 = jax.block_until_ready(
        mha_forward(x, wq, wk, wv, wo, bo, num_heads,
                    compute_dtype=jnp.float32, approx_recip=False))
    assert out_f32.shape == (B, T, d_out)
    assert jnp.allclose(out_f32, ref, atol=1e-2, rtol=1e-2), "f32 kernel mismatch"

    # Default fast path: bf16 MXU inputs with f32 accumulation, approx recip.
    out_bf16 = jax.block_until_ready(mha_forward(x, wq, wk, wv, wo, bo, num_heads))
    assert out_bf16.shape == (B, T, d_out)
    assert jnp.allclose(out_bf16, ref, atol=5e-2, rtol=5e-2), "bf16 kernel mismatch"

    # TODO(synk): dropout on attention weights omitted (eval-mode identity).
    print("KERNEL_OK")
</pallas_src>

<mosaic_0001>
module attributes {stable_mosaic.version = 11 : i64} {
  func.func @_qkv_proj_kernel(%arg0: i32, %arg1: i32, %arg2: i32, %arg3: memref<1x8x32xf32, #tpu.memory_space<vmem>>, %arg4: memref<32x32xf32, #tpu.memory_space<vmem>>, %arg5: memref<32x32xf32, #tpu.memory_space<vmem>>, %arg6: memref<32x32xf32, #tpu.memory_space<vmem>>, %arg7: memref<1x1x8x32xf32, #tpu.memory_space<vmem>>, %arg8: memref<1x1x8x32xf32, #tpu.memory_space<vmem>>, %arg9: memref<1x1x8x32xf32, #tpu.memory_space<vmem>>) attributes {dimension_semantics = [#tpu.dimension_semantics<parallel>, #tpu.dimension_semantics<parallel>, #tpu.dimension_semantics<parallel>], iteration_bounds = array<i64: 2, 1, 1>, scalar_prefetch = 0 : i64, scratch_operands = 0 : i64, tpu.core_type = #tpu.core_type<tc>, window_params = [{transform_indices = @transform_0, window_bounds = array<i64: 1, 8, 32>}, {transform_indices = @transform_1, window_bounds = array<i64: 32, 32>}, {transform_indices = @transform_2, window_bounds = array<i64: 32, 32>}, {transform_indices = @transform_3, window_bounds = array<i64: 32, 32>}, {transform_indices = @transform_4, window_bounds = array<i64: 1, 1, 8, 32>}, {transform_indices = @transform_5, window_bounds = array<i64: 1, 1, 8, 32>}, {transform_indices = @transform_6, window_bounds = array<i64: 1, 1, 8, 32>}]} {
    %c0 = arith.constant 0 : index
    %c0_0 = arith.constant 0 : index
    %c0_1 = arith.constant 0 : index
    %0 = vector.load %arg3[%c0, %c0_0, %c0_1] : memref<1x8x32xf32, #tpu.memory_space<vmem>>, vector<1x8x32xf32>
    %1 = vector.shape_cast %0 : vector<1x8x32xf32> to vector<8x32xf32>
    %c0_2 = arith.constant 0 : index
    %c0_3 = arith.constant 0 : index
    %2 = vector.load %arg4[%c0_2, %c0_3] : memref<32x32xf32, #tpu.memory_space<vmem>>, vector<32x32xf32>
    %cst = arith.constant dense<0.000000e+00> : vector<8x32xf32>
    %3 = tpu.matmul %1, %2, %cst {dimension_numbers = #tpu.dot_dimension_numbers<[1], [0], [0], [1], [0, 0, 1, 1], [], []>} : vector<8x32xf32>, vector<32x32xf32>, vector<8x32xf32> -> vector<8x32xf32>
    %c0_4 = arith.constant 0 : index
    %c0_5 = arith.constant 0 : index
    %c0_6 = arith.constant 0 : index
    %c0_7 = arith.constant 0 : index
    %4 = vector.load %arg7[%c0_4, %c0_5, %c0_6, %c0_7] : memref<1x1x8x32xf32, #tpu.memory_space<vmem>>, vector<1x1x8x32xf32>
    %5 = vector.shape_cast %4 : vector<1x1x8x32xf32> to vector<8x32xf32>
    %6 = vector.shape_cast %3 : vector<8x32xf32> to vector<1x1x8x32xf32>
    tpu.vector_store %arg7[%c0_4, %c0_5, %c0_6, %c0_7], %6 {strides = array<i32>} : memref<1x1x8x32xf32, #tpu.memory_space<vmem>>, vector<1x1x8x32xf32>,
    %c0_8 = arith.constant 0 : index
    %c0_9 = arith.constant 0 : index
    %7 = vector.load %arg5[%c0_8, %c0_9] : memref<32x32xf32, #tpu.memory_space<vmem>>, vector<32x32xf32>
    %cst_10 = arith.constant dense<0.000000e+00> : vector<8x32xf32>
    %8 = tpu.matmul %1, %7, %cst_10 {dimension_numbers = #tpu.dot_dimension_numbers<[1], [0], [0], [1], [0, 0, 1, 1], [], []>} : vector<8x32xf32>, vector<32x32xf32>, vector<8x32xf32> -> vector<8x32xf32>
    %c0_11 = arith.constant 0 : index
    %c0_12 = arith.constant 0 : index
    %c0_13 = arith.constant 0 : index
    %c0_14 = arith.constant 0 : index
    %9 = vector.load %arg8[%c0_11, %c0_12, %c0_13, %c0_14] : memref<1x1x8x32xf32, #tpu.memory_space<vmem>>, vector<1x1x8x32xf32>
    %10 = vector.shape_cast %9 : vector<1x1x8x32xf32> to vector<8x32xf32>
    %11 = vector.shape_cast %8 : vector<8x32xf32> to vector<1x1x8x32xf32>
    tpu.vector_store %arg8[%c0_11, %c0_12, %c0_13, %c0_14], %11 {strides = array<i32>} : memref<1x1x8x32xf32, #tpu.memory_space<vmem>>, vector<1x1x8x32xf32>,
    %c0_15 = arith.constant 0 : index
    %c0_16 = arith.constant 0 : index
    %12 = vector.load %arg6[%c0_15, %c0_16] : memref<32x32xf32, #tpu.memory_space<vmem>>, vector<32x32xf32>
    %cst_17 = arith.constant dense<0.000000e+00> : vector<8x32xf32>
    %13 = tpu.matmul %1, %12, %cst_17 {dimension_numbers = #tpu.dot_dimension_numbers<[1], [0], [0], [1], [0, 0, 1, 1], [], []>} : vector<8x32xf32>, vector<32x32xf32>, vector<8x32xf32> -> vector<8x32xf32>
    %c0_18 = arith.constant 0 : index
    %c0_19 = arith.constant 0 : index
    %c0_20 = arith.constant 0 : index
    %c0_21 = arith.constant 0 : index
    %14 = vector.load %arg9[%c0_18, %c0_19, %c0_20, %c0_21] : memref<1x1x8x32xf32, #tpu.memory_space<vmem>>, vector<1x1x8x32xf32>
    %15 = vector.shape_cast %14 : vector<1x1x8x32xf32> to vector<8x32xf32>
    %16 = vector.shape_cast %13 : vector<8x32xf32> to vector<1x1x8x32xf32>
    tpu.vector_store %arg9[%c0_18, %c0_19, %c0_20, %c0_21], %16 {strides = array<i32>} : memref<1x1x8x32xf32, #tpu.memory_space<vmem>>, vector<1x1x8x32xf32>,
    return
  }
  func.func @transform_0(%arg0: i32, %arg1: i32, %arg2: i32) -> (i32, i32, i32) {
    %c0_i32 = arith.constant 0 : i32
    %c0_i32_0 = arith.constant 0 : i32
    return %arg0, %arg1, %c0_i32 : i32, i32, i32
  }
  func.func @transform_1(%arg0: i32, %arg1: i32, %arg2: i32) -> (i32, i32) {
    %c0_i32 = arith.constant 0 : i32
    %c0_i32_0 = arith.constant 0 : i32
    return %c0_i32, %arg2 : i32, i32
  }
  func.func @transform_2(%arg0: i32, %arg1: i32, %arg2: i32) -> (i32, i32) {
    %c0_i32 = arith.constant 0 : i32
    %c0_i32_0 = arith.constant 0 : i32
    return %c0_i32, %arg2 : i32, i32
  }
  func.func @transform_3(%arg0: i32, %arg1: i32, %arg2: i32) -> (i32, i32) {
    %c0_i32 = arith.constant 0 : i32
    %c0_i32_0 = arith.constant 0 : i32
    return %c0_i32, %arg2 : i32, i32
  }
  func.func @transform_4(%arg0: i32, %arg1: i32, %arg2: i32) -> (i32, i32, i32, i32) {
    %c0_i32 = arith.constant 0 : i32
    %c0_i32_0 = arith.constant 0 : i32
    return %arg0, %arg2, %arg1, %c0_i32 : i32, i32, i32, i32
  }
  func.func @transform_5(%arg0: i32, %arg1: i32, %arg2: i32) -> (i32, i32, i32, i32) {
    %c0_i32 = arith.constant 0 : i32
    %c0_i32_0 = arith.constant 0 : i32
    return %arg0, %arg2, %arg1, %c0_i32 : i32, i32, i32, i32
  }
  func.func @transform_6(%arg0: i32, %arg1: i32, %arg2: i32) -> (i32, i32, i32, i32) {
    %c0_i32 = arith.constant 0 : i32
    %c0_i32_0 = arith.constant 0 : i32
    return %arg0, %arg2, %arg1, %c0_i32 : i32, i32, i32, i32
  }
}

</mosaic_0001>

<llo_original>
// kernel: tpu_custom_call.1
$region0: #{tpu_custom_call.1}
  #allocation0 [shape = 'u32[]', space=smem, size = 0x4, offset = 0x4, fixed_abs, tag = 'smem constant byte address 0x4 - core index']
  #allocation1 [shape = 'u32[144,128]{1,0:T(1,128)}', space=vmem, size = 0x12000, scoped, tag = 'internal scratch']
  %s0 = inlined_call_operand.hbm [shape: f32[2,8,32], index: 0, kind: input, shape index: {}]
  %s1 = inlined_call_operand.hbm [shape: f32[32,32], index: 1, kind: input, shape index: {}]
  %s2 = inlined_call_operand.hbm [shape: f32[32,32], index: 2, kind: input, shape index: {}]
  %s3 = inlined_call_operand.hbm [shape: f32[32,32], index: 3, kind: input, shape index: {}]
  %s4 = inlined_call_operand.hbm [shape: f32[2,1,8,32], index: 4, kind: output, shape index: {0}]
  %s5 = inlined_call_operand.hbm [shape: f32[2,1,8,32], index: 5, kind: output, shape index: {1}]
  %s6 = inlined_call_operand.hbm [shape: f32[2,1,8,32], index: 6, kind: output, shape index: {2}]
  %7 = xla_tuple %s4, %s5, %s6
  %s8 = sld [smem:[#allocation0]]
  $region81: #{tpu_custom_call.1} parent=0
    _
  %s10 = ssub.s32 1, %s8
  %s11 = scalar_select 0, %s10, %s8
  $region1: #{tpu_custom_call.1} parent=0
    #allocation2 [shape = 'u8[8192]{0}', space=vmem, size = 0x2000, scoped, tag = 'input window, operand 0']
    #allocation3 [shape = 's32[2]{0}', space=sflag, size = 0x8, scoped, tag = 'scoped memory for tpu_custom_call.1']
    #allocation4 [shape = 's32[2]{0}', space=sflag, size = 0x8, scoped, tag = 'scoped memory for tpu_custom_call.1']
    #allocation5 [shape = 'u8[16384]{0}', space=vmem, size = 0x4000, scoped, tag = 'input window, operand 1, single buffered']
    #allocation6 [shape = 's32[1]{0}', space=sflag, size = 0x4, scoped, tag = 'scoped memory for tpu_custom_call.1']
    #allocation7 [shape = 'u8[16384]{0}', space=vmem, size = 0x4000, scoped, tag = 'input window, operand 2, single buffered']
    #allocation8 [shape = 'u8[16384]{0}', space=vmem, size = 0x4000, scoped, tag = 'input window, operand 3, single buffered']
    #allocation9 [shape = 's32[1]{0}', space=sflag, size = 0x4, scoped, tag = 'scoped memory for tpu_custom_call.1']
    #allocation10 [shape = 'u8[8192]{0}', space=vmem, size = 0x2000, scoped, tag = 'output window, operand 0']
    #allocation11 [shape = 'u8[8192]{0}', space=vmem, size = 0x2000, scoped, tag = 'output window, operand 1']
    #allocation12 [shape = 's32[2]{0}', space=sflag, size = 0x8, scoped, tag = 'scoped memory for tpu_custom_call.1']
    #allocation13 [shape = 'u8[8192]{0}', space=vmem, size = 0x2000, scoped, tag = 'output window, operand 2']
    %12 = vsyncpa [#allocation3], 0
    %s13 = scalar_lea.sflag [#allocation3], 1
    %14 = vsyncpa %s13, 0
    %15 = vsyncpa [#allocation6], 0
    %16 = vsyncpa [#allocation9], 0
    %17 = vsyncpa [#allocation4], 0
    %s18 = scalar_lea.sflag [#allocation4], 1
    %19 = vsyncpa %s18, 0
    %20 = vsyncpa [#allocation12], 0
    %s21 = scalar_lea.sflag [#allocation12], 1
    %22 = vsyncpa %s21, 0
    loop: start=0, step=1, limit=4
    $region2: #{tpu_custom_call.1} parent=1 // loop_pre_header
      _
    $region3: #{tpu_custom_call.1} parent=1 // loop_header
      %s24 = sphi 0, %s28
      %p25 = scmp.ge.s32.totalorder %s24, 4
      %s31 = sphi 0, %s50
      %s32 = sphi 0, %s46
      %s33 = sphi 0, %s42
      %s34 = sphi 0, %s31
      %s35 = sphi 0, %s32
      %s36 = sphi 0, %s33
      %s37 = sphi 0, %s34
      %s38 = sphi 0, %s35
      %s39 = sphi 0, %s36
      %s55 = sphi 0, %s57
      %s58 = sphi 0, %s55
      %s59 = sphi 0, %s58
      %s75 = sphi 0, %s59
      %s81 = sphi 0, %s83
      %s84 = sphi 0, %s81
      %s85 = sphi 0, %s84
      %s101 = sphi 0, %s85
      %s107 = sphi 0, %s109
      %s110 = sphi 0, %s107
      %s111 = sphi 0, %s110
      %s127 = sphi 0, %s111
      %s133 = sphi 0, %s135
      %s136 = sphi 0, %s133
      %s137 = sphi 0, %s136
      %s153 = sphi 0, %s137
      %s163 = sphi 0, %s165
      %s166 = sphi 0, %s163
      %s167 = sphi 0, %s166
      %s183 = sphi 0, %s167
      %s193 = sphi 0, %s195
      %s196 = sphi 0, %s193
      %s197 = sphi 0, %s196
      %s213 = sphi 0, %s197
      %s223 = sphi 0, %s225
      %s226 = sphi 0, %s223
      %s227 = sphi 0, %s226
      %s243 = sphi 0, %s227
    $region4: #{tpu_custom_call.1} parent=1 // loop_header_branch
      %27 = sbr.rel (%p25) target = $region8
    $region5: #{tpu_custom_call.1} parent=1 // loop_body
      %s29 = ssub.s32 %s24, 1
      %s30 = ssub.s32 %s24, 2
      %s40 = sadd.s32 1, %s33
      %p41 = scmp.ge.s32.totalorder %s40, 1
      %s42 = scalar_select %p41, 0, %s40
      %s43 = sadd.s32 1, %s32
      %s44 = scalar_select %p41, %s43, %s32
      %p45 = scmp.ge.s32.totalorder %s44, 1
      %s46 = scalar_select %p45, 0, %s44
      %s47 = sadd.s32 1, %s31
      %s48 = scalar_select %p45, %s47, %s31
      %p49 = scmp.ge.s32.totalorder %s48, 2
      %s50 = scalar_select %p49, 0, %s48
      %s51 = ssub.s32 %s31, %s50
      %s52 = ssub.s32 %s32, %s46
      %s53 = sor.u32 %s51, %s52
      %p54 = scmp.eq.s32.totalorder %s53, 0
      %s56 = sadd.s32 %s55, 1
      %s57 = scalar_select %p54, %s55, %s56
      %p60 = pneg %p54
      %p61 = scmp.eq.s32.totalorder %s24, 1
      %p62 = por %p60, %p61
      %p63 = scmp.ne.s32.totalorder %s55, %s58
      %p64 = scmp.eq.s32.totalorder %s24, 0
      %p65 = por %p63, %p64
      %p66 = scmp.ne.s32.totalorder %s55, %s58
      %p67 = scmp.eq.s32.totalorder %s29, 1
      %p68 = por %p66, %p67
      %p69 = scmp.ne.s32.totalorder %s58, %s59
      %p70 = scmp.eq.s32.totalorder %s29, 0
      %p71 = por %p69, %p70
      %p72 = scmp.ne.s32.totalorder %s58, %s59
      %p73 = scmp.eq.s32.totalorder %s30, 1
      %p74 = por %p72, %p73
      %p76 = scmp.ne.s32.totalorder %s59, %s75
      %p77 = scmp.eq.s32.totalorder %s30, 0
      %p78 = por %p76, %p77
      %s79 = ssub.s32 %s33, %s42
      %p80 = scmp.eq.s32.totalorder %s79, 0
      %s82 = sadd.s32 %s81, 1
      %s83 = scalar_select %p80, %s81, %s82
      %p86 = pneg %p80
      %p87 = scmp.eq.s32.totalorder %s24, 1
      %p88 = por %p86, %p87
      %p89 = scmp.ne.s32.totalorder %s81, %s84
      %p90 = scmp.eq.s32.totalorder %s24, 0
      %p91 = por %p89, %p90
      %p92 = scmp.ne.s32.totalorder %s81, %s84
      %p93 = scmp.eq.s32.totalorder %s29, 1
      %p94 = por %p92, %p93
      %p95 = scmp.ne.s32.totalorder %s84, %s85
      %p96 = scmp.eq.s32.totalorder %s29, 0
      %p97 = por %p95, %p96
      %p98 = scmp.ne.s32.totalorder %s84, %s85
      %p99 = scmp.eq.s32.totalorder %s30, 1
      %p100 = por %p98, %p99
      %p102 = scmp.ne.s32.totalorder %s85, %s101
      %p103 = scmp.eq.s32.totalorder %s30, 0
      %p104 = por %p102, %p103
      %s105 = ssub.s32 %s33, %s42
      %p106 = scmp.eq.s32.totalorder %s105, 0
      %s108 = sadd.s32 %s107, 1
      %s109 = scalar_select %p106, %s107, %s108
      %p112 = pneg %p106
      %p113 = scmp.eq.s32.totalorder %s24, 1
      %p114 = por %p112, %p113
      %p115 = scmp.ne.s32.totalorder %s107, %s110
      %p116 = scmp.eq.s32.totalorder %s24, 0
      %p117 = por %p115, %p116
      %p118 = scmp.ne.s32.totalorder %s107, %s110
      %p119 = scmp.eq.s32.totalorder %s29, 1
      %p120 = por %p118, %p119
      %p121 = scmp.ne.s32.totalorder %s110, %s111
      %p122 = scmp.eq.s32.totalorder %s29, 0
      %p123 = por %p121, %p122
      %p124 = scmp.ne.s32.totalorder %s110, %s111
      %p125 = scmp.eq.s32.totalorder %s30, 1
      %p126 = por %p124, %p125
      %p128 = scmp.ne.s32.totalorder %s111, %s127
      %p129 = scmp.eq.s32.totalorder %s30, 0
      %p130 = por %p128, %p129
      %s131 = ssub.s32 %s33, %s42
      %p132 = scmp.eq.s32.totalorder %s131, 0
      %s134 = sadd.s32 %s133, 1
      %s135 = scalar_select %p132, %s133, %s134
      %p138 = pneg %p132
      %p139 = scmp.eq.s32.totalorder %s24, 1
      %p140 = por %p138, %p139
      %p141 = scmp.ne.s32.totalorder %s133, %s136
      %p142 = scmp.eq.s32.totalorder %s24, 0
      %p143 = por %p141, %p142
      %p144 = scmp.ne.s32.totalorder %s133, %s136
      %p145 = scmp.eq.s32.totalorder %s29, 1
      %p146 = por %p144, %p145
      %p147 = scmp.ne.s32.totalorder %s136, %s137
      %p148 = scmp.eq.s32.totalorder %s29, 0
      %p149 = por %p147, %p148
      %p150 = scmp.ne.s32.totalorder %s136, %s137
      %p151 = scmp.eq.s32.totalorder %s30, 1
      %p152 = por %p150, %p151
      %p154 = scmp.ne.s32.totalorder %s137, %s153
      %p155 = scmp.eq.s32.totalorder %s30, 0
      %p156 = por %p154, %p155
      %s157 = ssub.s32 %s31, %s50
      %s158 = ssub.s32 %s33, %s42
      %s159 = sor.u32 %s157, %s158
      %s160 = ssub.s32 %s32, %s46
      %s161 = sor.u32 %s159, %s160
      %p162 = scmp.eq.s32.totalorder %s161, 0
      %s164 = sadd.s32 %s163, 1
      %s165 = scalar_select %p162, %s163, %s164
      %p168 = pneg %p162
      %p169 = scmp.eq.s32.totalorder %s24, 1
      %p170 = por %p168, %p169
      %p171 = scmp.ne.s32.totalorder %s163, %s166
      %p172 = scmp.eq.s32.totalorder %s24, 0
      %p173 = por %p171, %p172
      %p174 = scmp.ne.s32.totalorder %s163, %s166
      %p175 = scmp.eq.s32.totalorder %s29, 1
      %p176 = por %p174, %p175
      %p177 = scmp.ne.s32.totalorder %s166, %s167
      %p178 = scmp.eq.s32.totalorder %s29, 0
      %p179 = por %p177, %p178
      %p180 = scmp.ne.s32.totalorder %s166, %s167
      %p181 = scmp.eq.s32.totalorder %s30, 1
      %p182 = por %p180, %p181
      %p184 = scmp.ne.s32.totalorder %s167, %s183
      %p185 = scmp.eq.s32.totalorder %s30, 0
      %p186 = por %p184, %p185
      %s187 = ssub.s32 %s31, %s50
      %s188 = ssub.s32 %s33, %s42
      %s189 = sor.u32 %s187, %s188
      %s190 = ssub.s32 %s32, %s46
      %s191 = sor.u32 %s189, %s190
      %p192 = scmp.eq.s32.totalorder %s191, 0
      %s194 = sadd.s32 %s193, 1
      %s195 = scalar_select %p192, %s193, %s194
      %p198 = pneg %p192
      %p199 = scmp.eq.s32.totalorder %s24, 1
      %p200 = por %p198, %p199
      %p201 = scmp.ne.s32.totalorder %s193, %s196
      %p202 = scmp.eq.s32.totalorder %s24, 0
      %p203 = por %p201, %p202
      %p204 = scmp.ne.s32.totalorder %s193, %s196
      %p205 = scmp.eq.s32.totalorder %s29, 1
      %p206 = por %p204, %p205
      %p207 = scmp.ne.s32.totalorder %s196, %s197
      %p208 = scmp.eq.s32.totalorder %s29, 0
      %p209 = por %p207, %p208
      %p210 = scmp.ne.s32.totalorder %s196, %s197
      %p211 = scmp.eq.s32.totalorder %s30, 1
      %p212 = por %p210, %p211
      %p214 = scmp.ne.s32.totalorder %s197, %s213
      %p215 = scmp.eq.s32.totalorder %s30, 0
      %p216 = por %p214, %p215
      %s217 = ssub.s32 %s31, %s50
      %s218 = ssub.s32 %s33, %s42
      %s219 = sor.u32 %s217, %s218
      %s220 = ssub.s32 %s32, %s46
      %s221 = sor.u32 %s219, %s220
      %p222 = scmp.eq.s32.totalorder %s221, 0
      %s224 = sadd.s32 %s223, 1
      %s225 = scalar_select %p222, %s223, %s224
      %p228 = pneg %p222
      %p229 = scmp.eq.s32.totalorder %s24, 1
      %p230 = por %p228, %p229
      %p231 = scmp.ne.s32.totalorder %s223, %s226
      %p232 = scmp.eq.s32.totalorder %s24, 0
      %p233 = por %p231, %p232
      %p234 = scmp.ne.s32.totalorder %s223, %s226
      %p235 = scmp.eq.s32.totalorder %s29, 1
      %p236 = por %p234, %p235
      %p237 = scmp.ne.s32.totalorder %s226, %s227
      %p238 = scmp.eq.s32.totalorder %s29, 0
      %p239 = por %p237, %p238
      %p240 = scmp.ne.s32.totalorder %s226, %s227
      %p241 = scmp.eq.s32.totalorder %s30, 1
      %p242 = por %p240, %p241
      %p244 = scmp.ne.s32.totalorder %s227, %s243
      %p245 = scmp.eq.s32.totalorder %s30, 0
      %p246 = por %p244, %p245
      %p247 = scmp.le.s32.totalorder 1, %s24
      %p248 = scmp.lt.s32.totalorder %s24, 3
      %p249 = pnand %p247, %p248
      %p250 = pneg %p249
      // Predicated region
      $region9: #{tpu_custom_call.1} parent=5 // pred_check
        _
      $region10: #{tpu_custom_call.1} parent=5 // pred_check_branch
        %252 = sbr.rel (%p249) target = $region12
      $region11: #{tpu_custom_call.1} parent=5 // pred_region
        %s253 = ssub.s32 %s24, 1
        // Predicated region
        $region13: #{tpu_custom_call.1} parent=11 // pred_check
          %p254 = pneg %p97
        $region14: #{tpu_custom_call.1} parent=11 // pred_check_branch
          %256 = sbr.rel (%p254) target = $region16
        $region15: #{tpu_custom_call.1} parent=11 // pred_region
          %s258 = ssub.s32 512, 512
          %259 = vsyncadd [#allocation6], %s258
          %s260 = smul.addr %s36, 128
          %s261 = scalar_lea.hbm %s1, %s260
          %s262 = sshll.u32 [#allocation5], 4
          %s263 = int_to_ptr.vmem [resolvable:$true] %s262
          %268 = dma.hbm_to_vmem [thread:$0]  %s261, 512, %s263, [#allocation6], 128, 128, 8
        $region16: #{tpu_custom_call.1} parent=11 // pred_fallthru
          _
        // Predicated region
        $region17: #{tpu_custom_call.1} parent=11 // pred_check
          %p269 = pneg %p123
        $region18: #{tpu_custom_call.1} parent=11 // pred_check_branch
          %271 = sbr.rel (%p269) target = $region20
        $region19: #{tpu_custom_call.1} parent=11 // pred_region
          %s273 = ssub.s32 512, 512
          %274 = vsyncadd [#allocation6], %s273
          %s275 = smul.addr %s36, 128
          %s276 = scalar_lea.hbm %s2, %s275
          %s277 = sshll.u32 [#allocation7], 4
          %s278 = int_to_ptr.vmem [resolvable:$true] %s277
          %283 = dma.hbm_to_vmem [thread:$0]  %s276, 512, %s278, [#allocation6], 128, 128, 8
        $region20: #{tpu_custom_call.1} parent=11 // pred_fallthru
          _
        // Predicated region
        $region21: #{tpu_custom_call.1} parent=11 // pred_check
          %p284 = pneg %p149
        $region22: #{tpu_custom_call.1} parent=11 // pred_check_branch
          %286 = sbr.rel (%p284) target = $region24
        $region23: #{tpu_custom_call.1} parent=11 // pred_region
          %s288 = ssub.s32 512, 512
          %289 = vsyncadd [#allocation9], %s288
          %s290 = smul.addr %s36, 128
          %s291 = scalar_lea.hbm %s3, %s290
          %s292 = sshll.u32 [#allocation8], 4
          %s293 = int_to_ptr.vmem [resolvable:$true] %s292
          %298 = dma.hbm_to_vmem [thread:$0]  %s291, 512, %s293, [#allocation9], 128, 128, 8
        $region24: #{tpu_custom_call.1} parent=11 // pred_fallthru
          _
      $region12: #{tpu_custom_call.1} parent=5 // pred_fallthru
        _
      %p299 = scmp.lt.s32.totalorder %s24, 2
      // Predicated region
      $region25: #{tpu_custom_call.1} parent=5 // pred_check
        %p300 = pneg %p299
      $region26: #{tpu_custom_call.1} parent=5 // pred_check_branch
        %302 = sbr.rel (%p300) target = $region28
      $region27: #{tpu_custom_call.1} parent=5 // pred_region
        // Predicated region
        $region29: #{tpu_custom_call.1} parent=27 // pred_check
          %p303 = pneg %p65
        $region30: #{tpu_custom_call.1} parent=27 // pred_check_branch
          %305 = sbr.rel (%p303) target = $region32
        $region31: #{tpu_custom_call.1} parent=27 // pred_region
          %s306 = sand.u32 %s55, 1
          %s307 = scalar_lea.sflag [#allocation3], %s306
          %s308 = sand.u32 %s55, 1
          %s309 = smul.addr %s308, 8
          %s310 = scalar_lea.vmem [#allocation2], %s309
          %s312 = ssub.s32 128, 128
          %313 = vsyncadd %s307, %s312
          %s314 = sadd.s32 %s32, %s31
          %s315 = smul.addr %s314, 128
          %s316 = scalar_lea.hbm %s0, %s315
          %s318 = sshll.u32 %s310, 4
          %s319 = int_to_ptr.vmem [resolvable:$true] %s318
          %321 = dma.hbm_to_vmem [thread:$0]  %s316, 128, %s319, %s307
        $region32: #{tpu_custom_call.1} parent=27 // pred_fallthru
          _
      $region28: #{tpu_custom_call.1} parent=5 // pred_fallthru
        _
      %p322 = scmp.le.s32.totalorder 1, %s24
      %p323 = scmp.lt.s32.totalorder %s24, 3
      %p324 = pnand %p322, %p323
      %p325 = pneg %p324
      // Predicated region
      $region33: #{tpu_custom_call.1} parent=5 // pred_check
        _
      $region34: #{tpu_custom_call.1} parent=5 // pred_check_branch
        %327 = sbr.rel (%p324) target = $region36
      $region35: #{tpu_custom_call.1} parent=5 // pred_region
        %s328 = ssub.s32 %s24, 1
        %s329 = sand.u32 %s58, 1
        %s330 = scalar_lea.sflag [#allocation3], %s329
        %s331 = sand.u32 %s58, 1
        %s332 = smul.addr %s331, 8
        %s333 = scalar_lea.vmem [#allocation2], %s332
        // Predicated region
        $region37: #{tpu_custom_call.1} parent=35 // pred_check
          %p334 = pneg %p71
        $region38: #{tpu_custom_call.1} parent=35 // pred_check_branch
          %336 = sbr.rel (%p334) target = $region40
        $region39: #{tpu_custom_call.1} parent=35 // pred_region
          %337 = dma.done %s330, 128
        $region40: #{tpu_custom_call.1} parent=35 // pred_fallthru
          _
        // Predicated region
        $region41: #{tpu_custom_call.1} parent=35 // pred_check
          %p338 = pneg %p97
        $region42: #{tpu_custom_call.1} parent=35 // pred_check_branch
          %340 = sbr.rel (%p338) target = $region44
        $region43: #{tpu_custom_call.1} parent=35 // pred_region
          %341 = dma.done [#allocation6], 512
        $region44: #{tpu_custom_call.1} parent=35 // pred_fallthru
          _
        // Predicated region
        $region45: #{tpu_custom_call.1} parent=35 // pred_check
          %p342 = pneg %p123
        $region46: #{tpu_custom_call.1} parent=35 // pred_check_branch
          %344 = sbr.rel (%p342) target = $region48
        $region47: #{tpu_custom_call.1} parent=35 // pred_region
          %345 = dma.done [#allocation6], 512
        $region48: #{tpu_custom_call.1} parent=35 // pred_fallthru
          _
        // Predicated region
        $region49: #{tpu_custom_call.1} parent=35 // pred_check
          %p346 = pneg %p149
        $region50: #{tpu_custom_call.1} parent=35 // pred_check_branch
          %348 = sbr.rel (%p346) target = $region52
        $region51: #{tpu_custom_call.1} parent=35 // pred_region
          %349 = dma.done [#allocation9], 512
        $region52: #{tpu_custom_call.1} parent=35 // pred_fallthru
          _
        %s350 = sand.u32 %s58, 1
        %s351 = scalar_lea.sflag [#allocation3], %s350
        %s352 = sand.u32 %s58, 1
        %s353 = smul.addr %s352, 8
        %s354 = scalar_lea.vmem [#allocation2], %s353
        %p355 = pneg %p71
        %p356 = pneg %p68
        %p357 = pneg %p97
        %p358 = pneg %p94
        %p359 = pneg %p123
        %p360 = pneg %p120
        %p361 = pneg %p149
        %p362 = pneg %p146
        %p363 = pneg %p179
        %p364 = pneg %p176
        %s365 = sand.u32 %s166, 1
        %s366 = scalar_lea.sflag [#allocation4], %s365
        %s367 = sand.u32 %s166, 1
        %s368 = smul.addr %s367, 8
        %s369 = scalar_lea.vmem [#allocation10], %s368
        %p370 = pneg %p209
        %p371 = pneg %p206
        %s372 = sand.u32 %s29, 1
        %s373 = scalar_lea.sflag [#allocation12], %s372
        %s374 = sand.u32 %s196, 1
        %s375 = smul.addr %s374, 8
        %s376 = scalar_lea.vmem [#allocation11], %s375
        %p377 = pneg %p239
        %p378 = pneg %p236
        %s379 = sand.u32 %s29, 1
        %s380 = scalar_lea.sflag [#allocation12], %s379
        %s381 = sand.u32 %s226, 1
        %s382 = smul.addr %s381, 8
        %s383 = scalar_lea.vmem [#allocation13], %s382
        %v384 = vld [vmem:[%s333] sm:$0xff]
        %v385 = vld [vmem:[#allocation5] sm:$0xff]
        %v386 = vld [vmem:[#allocation5 + $0x8] sm:$0xff]
        %v387 = vld [vmem:[#allocation5 + $0x10] sm:$0xff]
        %v388 = vld [vmem:[#allocation5 + $0x18] sm:$0xff]
        %vm389 = vcmask 261120
        %v391 = vsel %vm389, %v384, 0
        %393 = vmatprep.subr.mxu0 0.0
        %394 = vmatpush1.msra.mxu0 0.0
        %395 = vmatprep.subr.mxu0 0.0
        %396 = vmatpush1.msra.mxu0 0.0
        %397 = vmatprep.subr.mxu0 0.0
        %398 = vmatpush1.msra.mxu0 0.0
        %399 = vmatprep.subr.mxu0 0.0
        %400 = vmatpush1.msra.mxu0 0.0
        %401 = vmatprep.subr.mxu0 0.0
        %402 = vmatpush1.msra.mxu0 0.0
        %403 = vmatprep.subr.mxu0 0.0
        %404 = vmatpush1.msra.mxu0 0.0
        %405 = vmatprep.subr.mxu0 0.0
        %406 = vmatpush1.msra.mxu0 0.0
        %407 = vmatprep.subr.mxu0 0.0
        %408 = vmatpush1.msra.mxu0 0.0
        %409 = vmatprep.subr.mxu0 0.0
        %410 = vmatpush1.msra.mxu0 0.0
        %411 = vmatprep.subr.mxu0 0.0
        %412 = vmatpush1.msra.mxu0 0.0
        %413 = vmatprep.subr.mxu0 0.0
        %414 = vmatpush1.msra.mxu0 0.0
        %415 = vmatprep.subr.mxu0 0.0
        %416 = vmatpush1.msra.mxu0 0.0
        %417 = vmatprep.subr.mxu0 0.0
        %418 = vmatpush1.msra.mxu0 %v388
        %419 = vmatprep.subr.mxu0 0.0
        %420 = vmatpush1.msra.mxu0 %v387
        %421 = vmatprep.subr.mxu0 0.0
        %422 = vmatpush1.msra.mxu0 %v386
        %423 = vmatprep.subr.mxu0 0.0
        %424 = vmatpush1.msra.mxu0 %v385
        %425 = vmatprep.subr.mxu0 0.0
        %426 = vmatpush2.msra.mxu0 0.0
        %427 = vmatprep.subr.mxu0 0.0
        %428 = vmatpush2.msra.mxu0 0.0
        %429 = vmatprep.subr.mxu0 0.0
        %430 = vmatpush2.msra.mxu0 0.0
        %431 = vmatprep.subr.mxu0 0.0
        %432 = vmatpush2.msra.mxu0 0.0
        %433 = vmatprep.subr.mxu0 0.0
        %434 = vmatpush2.msra.mxu0 0.0
        %435 = vmatprep.subr.mxu0 0.0
        %436 = vmatpush2.msra.mxu0 0.0
        %437 = vmatprep.subr.mxu0 0.0
        %438 = vmatpush2.msra.mxu0 0.0
        %439 = vmatprep.subr.mxu0 0.0
        %440 = vmatpush2.msra.mxu0 0.0
        %441 = vmatprep.subr.mxu0 0.0
        %442 = vmatpush2.msra.mxu0 0.0
        %443 = vmatprep.subr.mxu0 0.0
        %444 = vmatpush2.msra.mxu0 0.0
        %445 = vmatprep.subr.mxu0 0.0
        %446 = vmatpush2.msra.mxu0 0.0
        %447 = vmatprep.subr.mxu0 0.0
        %448 = vmatpush2.msra.mxu0 0.0
        %449 = vmatprep.subr.mxu0 0.0
        %450 = vmatpush2.msra.mxu0 0.0
        %451 = vmatprep.subr.mxu0 0.0
        %452 = vmatpush2.msra.mxu0 0.0
        %453 = vmatprep.subr.mxu0 0.0
        %454 = vmatpush2.msra.mxu0 0.0
        %455 = vmatprep.subr.mxu0 0.0
        %456 = vmatpush2.msra.mxu0 0.0
        %457 = vmatprep.mubr.f32.mxu0 0.0
        %458 = vmatmul.mubr.f32.gmra.mxu0 %v391
        %v459 = vpop.f32.mrf.mxu0
        %v460 = vadd.f32 0.0, %v459
        %v461 = vpop.f32.mrf.mxu0
        %462 = vdwg.mxu0
        %463 = vst.msk [vmem:[%s369] sm:$0xff] %vm389, %v460
        %v464 = vld [vmem:[#allocation7] sm:$0xff]
        %v465 = vld [vmem:[#allocation7 + $0x8] sm:$0xff]
        %v466 = vld [vmem:[#allocation7 + $0x10] sm:$0xff]
        %v467 = vld [vmem:[#allocation7 + $0x18] sm:$0xff]
        %468 = vmatprep.subr.mxu0 0.0
        %469 = vmatpush1.msra.mxu0 0.0
        %470 = vmatprep.subr.mxu0 0.0
        %471 = vmatpush1.msra.mxu0 0.0
        %472 = vmatprep.subr.mxu0 0.0
        %473 = vmatpush1.msra.mxu0 0.0
        %474 = vmatprep.subr.mxu0 0.0
        %475 = vmatpush1.msra.mxu0 0.0
        %476 = vmatprep.subr.mxu0 0.0
        %477 = vmatpush1.msra.mxu0 0.0
        %478 = vmatprep.subr.mxu0 0.0
        %479 = vmatpush1.msra.mxu0 0.0
        %480 = vmatprep.subr.mxu0 0.0
        %481 = vmatpush1.msra.mxu0 0.0
        %482 = vmatprep.subr.mxu0 0.0
        %483 = vmatpush1.msra.mxu0 0.0
        %484 = vmatprep.subr.mxu0 0.0
        %485 = vmatpush1.msra.mxu0 0.0
        %486 = vmatprep.subr.mxu0 0.0
        %487 = vmatpush1.msra.mxu0 0.0
        %488 = vmatprep.subr.mxu0 0.0
        %489 = vmatpush1.msra.mxu0 0.0
        %490 = vmatprep.subr.mxu0 0.0
        %491 = vmatpush1.msra.mxu0 0.0
        %492 = vmatprep.subr.mxu0 0.0
        %493 = vmatpush1.msra.mxu0 %v467
        %494 = vmatprep.subr.mxu0 0.0
        %495 = vmatpush1.msra.mxu0 %v466
        %496 = vmatprep.subr.mxu0 0.0
        %497 = vmatpush1.msra.mxu0 %v465
        %498 = vmatprep.subr.mxu0 0.0
        %499 = vmatpush1.msra.mxu0 %v464
        %500 = vmatprep.subr.mxu0 0.0
        %501 = vmatpush2.msra.mxu0 0.0
        %502 = vmatprep.subr.mxu0 0.0
        %503 = vmatpush2.msra.mxu0 0.0
        %504 = vmatprep.subr.mxu0 0.0
        %505 = vmatpush2.msra.mxu0 0.0
        %506 = vmatprep.subr.mxu0 0.0
        %507 = vmatpush2.msra.mxu0 0.0
        %508 = vmatprep.subr.mxu0 0.0
        %509 = vmatpush2.msra.mxu0 0.0
        %510 = vmatprep.subr.mxu0 0.0
        %511 = vmatpush2.msra.mxu0 0.0
        %512 = vmatprep.subr.mxu0 0.0
        %513 = vmatpush2.msra.mxu0 0.0
        %514 = vmatprep.subr.mxu0 0.0
        %515 = vmatpush2.msra.mxu0 0.0
        %516 = vmatprep.subr.mxu0 0.0
        %517 = vmatpush2.msra.mxu0 0.0
        %518 = vmatprep.subr.mxu0 0.0
        %519 = vmatpush2.msra.mxu0 0.0
        %520 = vmatprep.subr.mxu0 0.0
        %521 = vmatpush2.msra.mxu0 0.0
        %522 = vmatprep.subr.mxu0 0.0
        %523 = vmatpush2.msra.mxu0 0.0
        %524 = vmatprep.subr.mxu0 0.0
        %525 = vmatpush2.msra.mxu0 0.0
        %526 = vmatprep.subr.mxu0 0.0
        %527 = vmatpush2.msra.mxu0 0.0
        %528 = vmatprep.subr.mxu0 0.0
        %529 = vmatpush2.msra.mxu0 0.0
        %530 = vmatprep.subr.mxu0 0.0
        %531 = vmatpush2.msra.mxu0 0.0
        %532 = vmatprep.mubr.f32.mxu0 0.0
        %533 = vmatmul.mubr.f32.gmra.mxu0 %v391
        %v534 = vpop.f32.mrf.mxu0
        %v535 = vadd.f32 0.0, %v534
        %v536 = vpop.f32.mrf.mxu0
        %537 = vdwg.mxu0
        %538 = vst.msk [vmem:[%s376] sm:$0xff] %vm389, %v535
        %v539 = vld [vmem:[#allocation8] sm:$0xff]
        %v540 = vld [vmem:[#allocation8 + $0x8] sm:$0xff]
        %v541 = vld [vmem:[#allocation8 + $0x10] sm:$0xff]
        %v542 = vld [vmem:[#allocation8 + $0x18] sm:$0xff]
        %543 = vmatprep.subr.mxu0 0.0
        %544 = vmatpush1.msra.mxu0 0.0
        %545 = vmatprep.subr.mxu0 0.0
        %546 = vmatpush1.msra.mxu0 0.0
        %547 = vmatprep.subr.mxu0 0.0
        %548 = vmatpush1.msra.mxu0 0.0
        %549 = vmatprep.subr.mxu0 0.0
        %550 = vmatpush1.msra.mxu0 0.0
        %551 = vmatprep.subr.mxu0 0.0
        %552 = vmatpush1.msra.mxu0 0.0
        %553 = vmatprep.subr.mxu0 0.0
        %554 = vmatpush1.msra.mxu0 0.0
        %555 = vmatprep.subr.mxu0 0.0
        %556 = vmatpush1.msra.mxu0 0.0
        %557 = vmatprep.subr.mxu0 0.0
        %558 = vmatpush1.msra.mxu0 0.0
        %559 = vmatprep.subr.mxu0 0.0
        %560 = vmatpush1.msra.mxu0 0.0
        %561 = vmatprep.subr.mxu0 0.0
        %562 = vmatpush1.msra.mxu0 0.0
        %563 = vmatprep.subr.mxu0 0.0
        %564 = vmatpush1.msra.mxu0 0.0
        %565 = vmatprep.subr.mxu0 0.0
        %566 = vmatpush1.msra.mxu0 0.0
        %567 = vmatprep.subr.mxu0 0.0
        %568 = vmatpush1.msra.mxu0 %v542
        %569 = vmatprep.subr.mxu0 0.0
        %570 = vmatpush1.msra.mxu0 %v541
        %571 = vmatprep.subr.mxu0 0.0
        %572 = vmatpush1.msra.mxu0 %v540
        %573 = vmatprep.subr.mxu0 0.0
        %574 = vmatpush1.msra.mxu0 %v539
        %575 = vmatprep.subr.mxu0 0.0
        %576 = vmatpush2.msra.mxu0 0.0
        %577 = vmatprep.subr.mxu0 0.0
        %578 = vmatpush2.msra.mxu0 0.0
        %579 = vmatprep.subr.mxu0 0.0
        %580 = vmatpush2.msra.mxu0 0.0
        %581 = vmatprep.subr.mxu0 0.0
        %582 = vmatpush2.msra.mxu0 0.0
        %583 = vmatprep.subr.mxu0 0.0
        %584 = vmatpush2.msra.mxu0 0.0
        %585 = vmatprep.subr.mxu0 0.0
        %586 = vmatpush2.msra.mxu0 0.0
        %587 = vmatprep.subr.mxu0 0.0
        %588 = vmatpush2.msra.mxu0 0.0
        %589 = vmatprep.subr.mxu0 0.0
        %590 = vmatpush2.msra.mxu0 0.0
        %591 = vmatprep.subr.mxu0 0.0
        %592 = vmatpush2.msra.mxu0 0.0
        %593 = vmatprep.subr.mxu0 0.0
        %594 = vmatpush2.msra.mxu0 0.0
        %595 = vmatprep.subr.mxu0 0.0
        %596 = vmatpush2.msra.mxu0 0.0
        %597 = vmatprep.subr.mxu0 0.0
        %598 = vmatpush2.msra.mxu0 0.0
        %599 = vmatprep.subr.mxu0 0.0
        %600 = vmatpush2.msra.mxu0 0.0
        %601 = vmatprep.subr.mxu0 0.0
        %602 = vmatpush2.msra.mxu0 0.0
        %603 = vmatprep.subr.mxu0 0.0
        %604 = vmatpush2.msra.mxu0 0.0
        %605 = vmatprep.subr.mxu0 0.0
        %606 = vmatpush2.msra.mxu0 0.0
        %607 = vmatprep.mubr.f32.mxu0 0.0
        %608 = vmatmul.mubr.f32.gmra.mxu0 %v391
        %v609 = vpop.f32.mrf.mxu0
        %v610 = vadd.f32 0.0, %v609
        %v611 = vpop.f32.mrf.mxu0
        %612 = vdwg.mxu0
        %613 = vst.msk [vmem:[%s383] sm:$0xff] %vm389, %v610
        %s614 = sand.u32 %s166, 1
        %s615 = scalar_lea.sflag [#allocation4], %s614
        %s616 = sand.u32 %s166, 1
        %s617 = smul.addr %s616, 8
        %s618 = scalar_lea.vmem [#allocation10], %s617
        %s619 = sand.u32 %s29, 1
        %s620 = scalar_lea.sflag [#allocation12], %s619
        %s621 = sand.u32 %s196, 1
        %s622 = smul.addr %s621, 8
        %s623 = scalar_lea.vmem [#allocation11], %s622
        %s624 = sand.u32 %s29, 1
        %s625 = scalar_lea.sflag [#allocation12], %s624
        %s626 = sand.u32 %s226, 1
        %s627 = smul.addr %s626, 8
        %s628 = scalar_lea.vmem [#allocation13], %s627
        // Predicated region
        $region53: #{tpu_custom_call.1} parent=35 // pred_check
          %p629 = pneg %p176
        $region54: #{tpu_custom_call.1} parent=35 // pred_check_branch
          %631 = sbr.rel (%p629) target = $region56
        $region55: #{tpu_custom_call.1} parent=35 // pred_region
          %s633 = ssub.s32 128, 128
          %634 = vsyncadd %s615, %s633
          %s635 = sadd.s32 %s35, %s36
          %s636 = sadd.s32 %s635, %s34
          %s637 = smul.addr %s636, 128
          %s638 = scalar_lea.hbm %s4, %s637
          %s640 = sshll.u32 %s618, 4
          %s641 = int_to_ptr.vmem [resolvable:$true] %s640
          %643 = dma.vmem_to_hbm [thread:$0]  %s641, 128, %s638, %s615
        $region56: #{tpu_custom_call.1} parent=35 // pred_fallthru
          _
        // Predicated region
        $region57: #{tpu_custom_call.1} parent=35 // pred_check
          %p644 = pneg %p206
        $region58: #{tpu_custom_call.1} parent=35 // pred_check_branch
          %646 = sbr.rel (%p644) target = $region60
        $region59: #{tpu_custom_call.1} parent=35 // pred_region
          %s648 = ssub.s32 128, 128
          %649 = vsyncadd %s620, %s648
          %s650 = sadd.s32 %s35, %s36
          %s651 = sadd.s32 %s650, %s34
          %s652 = smul.addr %s651, 128
          %s653 = scalar_lea.hbm %s5, %s652
          %s655 = sshll.u32 %s623, 4
          %s656 = int_to_ptr.vmem [resolvable:$true] %s655
          %658 = dma.vmem_to_hbm [thread:$0]  %s656, 128, %s653, %s620
        $region60: #{tpu_custom_call.1} parent=35 // pred_fallthru
          _
        // Predicated region
        $region61: #{tpu_custom_call.1} parent=35 // pred_check
          %p659 = pneg %p236
        $region62: #{tpu_custom_call.1} parent=35 // pred_check_branch
          %661 = sbr.rel (%p659) target = $region64
        $region63: #{tpu_custom_call.1} parent=35 // pred_region
          %s663 = ssub.s32 128, 128
          %664 = vsyncadd %s625, %s663
          %s665 = sadd.s32 %s35, %s36
          %s666 = sadd.s32 %s665, %s34
          %s667 = smul.addr %s666, 128
          %s668 = scalar_lea.hbm %s6, %s667
          %s670 = sshll.u32 %s628, 4
          %s671 = int_to_ptr.vmem [resolvable:$true] %s670
          %673 = dma.vmem_to_hbm [thread:$0]  %s671, 128, %s668, %s625
        $region64: #{tpu_custom_call.1} parent=35 // pred_fallthru
          _
      $region36: #{tpu_custom_call.1} parent=5 // pred_fallthru
        _
      %p674 = scmp.le.s32.totalorder 2, %s24
      // Predicated region
      $region65: #{tpu_custom_call.1} parent=5 // pred_check
        %p675 = pneg %p674
      $region66: #{tpu_custom_call.1} parent=5 // pred_check_branch
        %677 = sbr.rel (%p675) target = $region68
      $region67: #{tpu_custom_call.1} parent=5 // pred_region
        %s678 = ssub.s32 %s24, 2
        // Predicated region
        $region69: #{tpu_custom_call.1} parent=67 // pred_check
          %p679 = pneg %p182
        $region70: #{tpu_custom_call.1} parent=67 // pred_check_branch
          %681 = sbr.rel (%p679) target = $region72
        $region71: #{tpu_custom_call.1} parent=67 // pred_region
          %s682 = sand.u32 %s167, 1
          %s683 = scalar_lea.sflag [#allocation4], %s682
          %s684 = sand.u32 %s167, 1
          %s685 = smul.addr %s684, 8
          %s686 = scalar_lea.vmem [#allocation10], %s685
          %687 = dma.done %s683, 128
        $region72: #{tpu_custom_call.1} parent=67 // pred_fallthru
          _
        // Predicated region
        $region73: #{tpu_custom_call.1} parent=67 // pred_check
          %p688 = pneg %p212
        $region74: #{tpu_custom_call.1} parent=67 // pred_check_branch
          %690 = sbr.rel (%p688) target = $region76
        $region75: #{tpu_custom_call.1} parent=67 // pred_region
          %s691 = sand.u32 %s30, 1
          %s692 = scalar_lea.sflag [#allocation12], %s691
          %s693 = sand.u32 %s197, 1
          %s694 = smul.addr %s693, 8
          %s695 = scalar_lea.vmem [#allocation11], %s694
          %696 = dma.done %s692, 128
        $region76: #{tpu_custom_call.1} parent=67 // pred_fallthru
          _
        // Predicated region
        $region77: #{tpu_custom_call.1} parent=67 // pred_check
          %p697 = pneg %p242
        $region78: #{tpu_custom_call.1} parent=67 // pred_check_branch
          %699 = sbr.rel (%p697) target = $region80
        $region79: #{tpu_custom_call.1} parent=67 // pred_region
          %s700 = sand.u32 %s30, 1
          %s701 = scalar_lea.sflag [#allocation12], %s700
          %s702 = sand.u32 %s227, 1
          %s703 = smul.addr %s702, 8
          %s704 = scalar_lea.vmem [#allocation13], %s703
          %705 = dma.done %s701, 128
        $region80: #{tpu_custom_call.1} parent=67 // pred_fallthru
          _
      $region68: #{tpu_custom_call.1} parent=5 // pred_fallthru
        _
    $region6: #{tpu_custom_call.1} parent=1 // loop_footer
      %s28 = sadd.s32 1, %s24
    $region7: #{tpu_custom_call.1} parent=1 // loop_footer_branch
      %23 = sbr.rel target = $region3
    $region8: #{tpu_custom_call.1} parent=1 // loop_exit
      _
    %706 = vsyncpa [#allocation3], 1
    %s707 = scalar_lea.sflag [#allocation3], 1
    %708 = vsyncpa %s707, 1
    %709 = vsyncpa [#allocation6], 1
    %710 = vsyncpa [#allocation9], 1
    %711 = vsyncpa [#allocation4], 1
    %s712 = scalar_lea.sflag [#allocation4], 1
    %713 = vsyncpa %s712, 1
    %714 = vsyncpa [#allocation12], 1
    %s715 = scalar_lea.sflag [#allocation12], 1
    %716 = vsyncpa %s715, 1

</llo_original>
